<compile_context>
chip_gen: v6e
topology: v6e:2x2x1
jax: 0.10.0
libtpu: 0.0.40
codegen_flags: <defaults>
</compile_context>

<pallas_src>
import jax
import jax.numpy as jnp
from jax import lax
from jax.experimental import pallas as pl
from jax.experimental.pallas import tpu as pltpu

STATE_DIM = 3      # Pendulum-v1 observation dim
ACTION_DIM = 1     # Pendulum-v1 action dim
HIDDEN = 256
K_PAD = 8          # layer-1 contraction padded 3 -> 8 (one sublane) for the MXU
HEAD_PAD = 128     # fused mu/log_std head padded to one full lane group (unmasked vst)
INIT_W = 0.003
MIN_LOG_STD = -20.0
MAX_LOG_STD = 2.0
TB_CAP = 2048      # batch-tile cap (amortizes ~0.35us per-grid-step overhead)


def actor_kernel(x_ref, w1_ref, b1_ref, w2_ref, b2_ref, wh_ref, bh_ref, out_ref):
    # x tile: (TB, K_PAD) f32, columns >= STATE_DIM are zero. Cast to bf16 for the MXU;
    # all elementwise math stays f32.
    x16 = x_ref[...].astype(jnp.bfloat16)

    # ---- layer 1: Linear(3, 256) + ReLU as a K=8 bf16 MXU matmul (f32 accumulation) ----
    h1 = jnp.dot(x16, w1_ref[...], preferred_element_type=jnp.float32) + b1_ref[...]
    h1 = jnp.maximum(h1, 0.0)

    # ---- layer 2: Linear(256, 256) + ReLU (bf16 MXU, f32 acc) ----
    h2 = jnp.dot(h1.astype(jnp.bfloat16), w2_ref[...],
                 preferred_element_type=jnp.float32) + b2_ref[...]
    h2 = jnp.maximum(h2, 0.0)

    # ---- fused heads: one (256, 128)-padded bf16 matmul; lanes [0,A)=mu, [A,2A)=log_std ----
    head = jnp.dot(h2.astype(jnp.bfloat16), wh_ref[...],
                   preferred_element_type=jnp.float32) + bh_ref[...]
    # exp on the mu/padding lanes is intentional dead work on the EUP slot (clip bounds it).
    std = jnp.exp(jnp.clip(head, MIN_LOG_STD, MAX_LOG_STD))
    lane = lax.broadcasted_iota(jnp.int32, head.shape, 1)
    # lanes < ACTION_DIM carry mu (raw head); the next ACTION_DIM lanes carry std
    out_ref[...] = jnp.where(lane < ACTION_DIM, head, std)


def prepare_params(params):
    """One-time parameter prep (outside the per-call path):
       - layer-1 weight padded (3->8 input rows) and cast to bf16
       - w2 cast to bf16
       - mu/log_std heads fused into one (HIDDEN, HEAD_PAD) bf16 weight + f32 bias
       Biases stay f32."""
    w1, b1, w2, b2, wmu, bmu, wls, bls = params
    w1p = jnp.pad(w1, ((0, K_PAD - STATE_DIM), (0, 0))).astype(jnp.bfloat16)
    wh = jnp.concatenate([wmu, wls], axis=1)          # (HIDDEN, 2*ACTION_DIM)
    bh = jnp.concatenate([bmu, bls], axis=1)          # (1, 2*ACTION_DIM)
    pad = HEAD_PAD - 2 * ACTION_DIM
    wh = jnp.pad(wh, ((0, 0), (0, pad))).astype(jnp.bfloat16)
    bh = jnp.pad(bh, ((0, 0), (0, pad)))
    return (w1p, b1, w2.astype(jnp.bfloat16), b2, wh, bh)


def _round_up(n, m):
    return ((n + m - 1) // m) * m


def _batch_tile(B):
    """Batch tile choice:
       - tiny B: one tile (splitting only adds per-step overhead),
       - moderate B: exactly 2 tiles (8-aligned) so the "parallel" axis feeds both
         v7x TensorCores,
       - large B: <= TB_CAP rows/tile with an even step count for TC balance."""
    if B <= 128:
        return B
    if B <= 2 * TB_CAP:
        return _round_up(pl.cdiv(B, 2), 8)
    steps = _round_up(pl.cdiv(B, TB_CAP), 2)
    return _round_up(pl.cdiv(B, steps), 8)


def actor_forward_slab(x, prepared):
    """x: (B, STATE_DIM) float32. Returns the (B, HEAD_PAD) lane-dense output slab:
    lanes [0, ACTION_DIM) = mu, lanes [ACTION_DIM, 2*ACTION_DIM) = std, rest padding.
    Slice at the point of use inside the same jit so XLA fuses the slice."""
    B = x.shape[0]
    w1p, b1, w2, b2, wh, bh = prepared
    xp = jnp.pad(x, ((0, 0), (0, K_PAD - STATE_DIM)))   # (B, K_PAD) f32, zero-padded

    TB = _batch_tile(B)
    grid = (pl.cdiv(B, TB),)

    def const(shape):
        # weights/biases stay VMEM-resident across batch tiles (constant index_map)
        return pl.BlockSpec(shape, lambda i: (0, 0))

    return pl.pallas_call(
        actor_kernel,
        out_shape=jax.ShapeDtypeStruct((B, HEAD_PAD), jnp.float32),
        grid_spec=pltpu.PrefetchScalarGridSpec(
            num_scalar_prefetch=0,
            grid=grid,
            in_specs=[
                pl.BlockSpec((TB, K_PAD), lambda i: (i, 0)),   # x: tiled over batch
                const((K_PAD, HIDDEN)),                        # w1 (bf16, K-padded)
                const((1, HIDDEN)),                            # b1 (f32)
                const((HIDDEN, HIDDEN)),                       # w2 (bf16)
                const((1, HIDDEN)),                            # b2 (f32)
                const((HIDDEN, HEAD_PAD)),                     # fused head weight (bf16)
                const((1, HEAD_PAD)),                          # fused head bias (f32)
            ],
            out_specs=pl.BlockSpec((TB, HEAD_PAD), lambda i: (i, 0)),
        ),
        compiler_params=pltpu.CompilerParams(
            dimension_semantics=("parallel",),       # shard batch tiles across TCs (v7x)
            vmem_limit_bytes=32 * 1024 * 1024,       # headroom over v5e's 16 MiB default
        ),
    )(xp, w1p, b1, w2, b2, wh, bh)


def actor_forward(x, prepared):
    """Convenience wrapper returning (mu, std), each (B, ACTION_DIM)."""
    out = actor_forward_slab(x, prepared)
    return out[:, :ACTION_DIM], out[:, ACTION_DIM:2 * ACTION_DIM]


def init_params(key):
    """Deterministic init mirroring PyTorch:
       - l1/l2: default nn.Linear init, U(-1/sqrt(fan_in), 1/sqrt(fan_in))
       - mu_head/log_std_head: U(-init_w, init_w)
       Weights stored as (in, out), f32."""
    ks = jax.random.split(key, 8)

    def u(k, shape, bound):
        return jax.random.uniform(k, shape, jnp.float32, -bound, bound)

    bnd1 = 1.0 / jnp.sqrt(STATE_DIM)
    bnd2 = 1.0 / jnp.sqrt(HIDDEN)
    w1 = u(ks[0], (STATE_DIM, HIDDEN), bnd1)
    b1 = u(ks[1], (1, HIDDEN), bnd1)
    w2 = u(ks[2], (HIDDEN, HIDDEN), bnd2)
    b2 = u(ks[3], (1, HIDDEN), bnd2)
    wmu = u(ks[4], (HIDDEN, ACTION_DIM), INIT_W)
    bmu = u(ks[5], (1, ACTION_DIM), INIT_W)
    wls = u(ks[6], (HIDDEN, ACTION_DIM), INIT_W)
    bls = u(ks[7], (1, ACTION_DIM), INIT_W)
    return (w1, b1, w2, b2, wmu, bmu, wls, bls)


def actor_forward_ref(x, params):
    """Plain-JAX f32 reference (unfused, original PyTorch semantics)."""
    w1, b1, w2, b2, wmu, bmu, wls, bls = params
    h1 = jnp.maximum(x @ w1 + b1, 0.0)
    h2 = jnp.maximum(h1 @ w2 + b2, 0.0)
    mu = h2 @ wmu + bmu
    log_std = jnp.clip(h2 @ wls + bls, MIN_LOG_STD, MAX_LOG_STD)
    return mu, jnp.exp(log_std)


# TODO(synk): Actor.evaluate (Normal sampling + tanh log-prob correction) is not part of
# forward(); it is left to plain JAX on top of (mu, std).

if __name__ == "__main__":
    key = jax.random.PRNGKey(0)
    kp, kx = jax.random.split(key)
    params = init_params(kp)
    prepared = prepare_params(params)

    B = 8  # small batch of Pendulum states
    x = jax.random.normal(kx, (B, STATE_DIM), jnp.float32)

    fwd = jax.jit(actor_forward)
    mu, std = jax.block_until_ready(fwd(x, prepared))
    mu_ref, std_ref = actor_forward_ref(x, params)

    assert mu.shape == (B, ACTION_DIM) and std.shape == (B, ACTION_DIM)
    # bf16 MXU operands (f32 accumulation) -> tolerances relaxed vs the f32 reference
    assert jnp.allclose(mu, mu_ref, atol=2e-2, rtol=2e-2)
    assert jnp.allclose(std, std_ref, atol=2e-2, rtol=2e-2)

    print("KERNEL_OK")
</pallas_src>

<mosaic_0001>
module attributes {stable_mosaic.version = 11 : i64} {
  func.func @actor_kernel(%arg0: i32, %arg1: memref<8x8xf32, #tpu.memory_space<vmem>>, %arg2: memref<8x256xbf16, #tpu.memory_space<vmem>>, %arg3: memref<1x256xf32, #tpu.memory_space<vmem>>, %arg4: memref<256x256xbf16, #tpu.memory_space<vmem>>, %arg5: memref<1x256xf32, #tpu.memory_space<vmem>>, %arg6: memref<256x128xbf16, #tpu.memory_space<vmem>>, %arg7: memref<1x128xf32, #tpu.memory_space<vmem>>, %arg8: memref<8x128xf32, #tpu.memory_space<vmem>>) attributes {dimension_semantics = [#tpu.dimension_semantics<parallel>], iteration_bounds = array<i64: 1>, scalar_prefetch = 0 : i64, scratch_operands = 0 : i64, tpu.core_type = #tpu.core_type<tc>, window_params = [{transform_indices = @transform_0, window_bounds = array<i64: 8, 8>}, {pipeline_mode = #tpu.pipeline_mode<synchronous>, transform_indices = @transform_1, window_bounds = array<i64: 8, 256>}, {pipeline_mode = #tpu.pipeline_mode<synchronous>, transform_indices = @transform_2, window_bounds = array<i64: 1, 256>}, {pipeline_mode = #tpu.pipeline_mode<synchronous>, transform_indices = @transform_3, window_bounds = array<i64: 256, 256>}, {pipeline_mode = #tpu.pipeline_mode<synchronous>, transform_indices = @transform_4, window_bounds = array<i64: 1, 256>}, {pipeline_mode = #tpu.pipeline_mode<synchronous>, transform_indices = @transform_5, window_bounds = array<i64: 256, 128>}, {pipeline_mode = #tpu.pipeline_mode<synchronous>, transform_indices = @transform_6, window_bounds = array<i64: 1, 128>}, {transform_indices = @transform_7, window_bounds = array<i64: 8, 128>}]} {
    %c0 = arith.constant 0 : index
    %c0_0 = arith.constant 0 : index
    %0 = vector.load %arg1[%c0, %c0_0] : memref<8x8xf32, #tpu.memory_space<vmem>>, vector<8x8xf32>
    %1 = arith.truncf %0 : vector<8x8xf32> to vector<8x8xbf16>
    %c0_1 = arith.constant 0 : index
    %c0_2 = arith.constant 0 : index
    %2 = vector.load %arg2[%c0_1, %c0_2] : memref<8x256xbf16, #tpu.memory_space<vmem>>, vector<8x256xbf16>
    %cst = arith.constant dense<0.000000e+00> : vector<8x256xf32>
    %3 = tpu.matmul %1, %2, %cst {dimension_numbers = #tpu.dot_dimension_numbers<[1], [0], [0], [1], [0, 0, 1, 1], [], []>} : vector<8x8xbf16>, vector<8x256xbf16>, vector<8x256xf32> -> vector<8x256xf32>
    %c0_3 = arith.constant 0 : index
    %c0_4 = arith.constant 0 : index
    %4 = vector.load %arg3[%c0_3, %c0_4] : memref<1x256xf32, #tpu.memory_space<vmem>>, vector<1x256xf32>
    %5 = vector.broadcast %4 : vector<1x256xf32> to vector<8x256xf32>
    %6 = arith.addf %3, %5 : vector<8x256xf32>
    %cst_5 = arith.constant 0.000000e+00 : f32
    %7 = vector.broadcast %cst_5 : f32 to vector<8x256xf32>
    %8 = arith.maximumf %6, %7 : vector<8x256xf32>
    %9 = arith.truncf %8 : vector<8x256xf32> to vector<8x256xbf16>
    %c0_6 = arith.constant 0 : index
    %c0_7 = arith.constant 0 : index
    %10 = vector.load %arg4[%c0_6, %c0_7] : memref<256x256xbf16, #tpu.memory_space<vmem>>, vector<256x256xbf16>
    %cst_8 = arith.constant dense<0.000000e+00> : vector<8x256xf32>
    %11 = tpu.matmul %9, %10, %cst_8 {dimension_numbers = #tpu.dot_dimension_numbers<[1], [0], [0], [1], [0, 0, 1, 1], [], []>} : vector<8x256xbf16>, vector<256x256xbf16>, vector<8x256xf32> -> vector<8x256xf32>
    %c0_9 = arith.constant 0 : index
    %c0_10 = arith.constant 0 : index
    %12 = vector.load %arg5[%c0_9, %c0_10] : memref<1x256xf32, #tpu.memory_space<vmem>>, vector<1x256xf32>
    %13 = vector.broadcast %12 : vector<1x256xf32> to vector<8x256xf32>
    %14 = arith.addf %11, %13 : vector<8x256xf32>
    %cst_11 = arith.constant 0.000000e+00 : f32
    %15 = vector.broadcast %cst_11 : f32 to vector<8x256xf32>
    %16 = arith.maximumf %14, %15 : vector<8x256xf32>
    %17 = arith.truncf %16 : vector<8x256xf32> to vector<8x256xbf16>
    %c0_12 = arith.constant 0 : index
    %c0_13 = arith.constant 0 : index
    %18 = vector.load %arg6[%c0_12, %c0_13] : memref<256x128xbf16, #tpu.memory_space<vmem>>, vector<256x128xbf16>
    %cst_14 = arith.constant dense<0.000000e+00> : vector<8x128xf32>
    %19 = tpu.matmul %17, %18, %cst_14 {dimension_numbers = #tpu.dot_dimension_numbers<[1], [0], [0], [1], [0, 0, 1, 1], [], []>} : vector<8x256xbf16>, vector<256x128xbf16>, vector<8x128xf32> -> vector<8x128xf32>
    %c0_15 = arith.constant 0 : index
    %c0_16 = arith.constant 0 : index
    %20 = vector.load %arg7[%c0_15, %c0_16] : memref<1x128xf32, #tpu.memory_space<vmem>>, vector<1x128xf32>
    %21 = vector.broadcast %20 : vector<1x128xf32> to vector<8x128xf32>
    %22 = arith.addf %19, %21 : vector<8x128xf32>
    %cst_17 = arith.constant -2.000000e+01 : f32
    %cst_18 = arith.constant 2.000000e+00 : f32
    %23 = vector.broadcast %cst_17 : f32 to vector<8x128xf32>
    %24 = arith.maximumf %23, %22 : vector<8x128xf32>
    %25 = vector.broadcast %cst_18 : f32 to vector<8x128xf32>
    %26 = arith.minimumf %25, %24 : vector<8x128xf32>
    %27 = math.exp %26 : vector<8x128xf32>
    %28 = tpu.iota {dimensions = array<i32: 1>} : vector<8x128xi32>
    %c1_i32 = arith.constant 1 : i32
    %29 = vector.broadcast %c1_i32 : i32 to vector<8x128xi32>
    %30 = arith.cmpi slt, %28, %29 : vector<8x128xi32>
    %31 = arith.select %30, %22, %27 : vector<8x128xi1>, vector<8x128xf32>
    %c0_19 = arith.constant 0 : index
    %c0_20 = arith.constant 0 : index
    %32 = vector.load %arg8[%c0_19, %c0_20] : memref<8x128xf32, #tpu.memory_space<vmem>>, vector<8x128xf32>
    tpu.vector_store %arg8[%c0_19, %c0_20], %31 {strides = array<i32>} : memref<8x128xf32, #tpu.memory_space<vmem>>, vector<8x128xf32>,
    return
  }
  func.func @transform_0(%arg0: i32) -> (i32, i32) {
    %c0_i32 = arith.constant 0 : i32
    %c0_i32_0 = arith.constant 0 : i32
    return %arg0, %c0_i32 : i32, i32
  }
  func.func @transform_1(%arg0: i32) -> (i32, i32) {
    %c0_i32 = arith.constant 0 : i32
    %c0_i32_0 = arith.constant 0 : i32
    %c0_i32_1 = arith.constant 0 : i32
    return %c0_i32, %c0_i32_0 : i32, i32
  }
  func.func @transform_2(%arg0: i32) -> (i32, i32) {
    %c0_i32 = arith.constant 0 : i32
    %c0_i32_0 = arith.constant 0 : i32
    %c0_i32_1 = arith.constant 0 : i32
    return %c0_i32, %c0_i32_0 : i32, i32
  }
  func.func @transform_3(%arg0: i32) -> (i32, i32) {
    %c0_i32 = arith.constant 0 : i32
    %c0_i32_0 = arith.constant 0 : i32
    %c0_i32_1 = arith.constant 0 : i32
    return %c0_i32, %c0_i32_0 : i32, i32
  }
  func.func @transform_4(%arg0: i32) -> (i32, i32) {
    %c0_i32 = arith.constant 0 : i32
    %c0_i32_0 = arith.constant 0 : i32
    %c0_i32_1 = arith.constant 0 : i32
    return %c0_i32, %c0_i32_0 : i32, i32
  }
  func.func @transform_5(%arg0: i32) -> (i32, i32) {
    %c0_i32 = arith.constant 0 : i32
    %c0_i32_0 = arith.constant 0 : i32
    %c0_i32_1 = arith.constant 0 : i32
    return %c0_i32, %c0_i32_0 : i32, i32
  }
  func.func @transform_6(%arg0: i32) -> (i32, i32) {
    %c0_i32 = arith.constant 0 : i32
    %c0_i32_0 = arith.constant 0 : i32
    %c0_i32_1 = arith.constant 0 : i32
    return %c0_i32, %c0_i32_0 : i32, i32
  }
  func.func @transform_7(%arg0: i32) -> (i32, i32) {
    %c0_i32 = arith.constant 0 : i32
    %c0_i32_0 = arith.constant 0 : i32
    return %arg0, %c0_i32 : i32, i32
  }
}

</mosaic_0001>

<llo_original>
// kernel: actor_forward.1
$region0: #{actor_forward.1}
  #allocation0 [shape = 'u32[]', space=smem, size = 0x4, offset = 0x4, fixed_abs, tag = 'smem constant byte address 0x4 - core index']
  #allocation1 [shape = 'u32[144,128]{1,0:T(1,128)}', space=vmem, size = 0x12000, scoped, tag = 'internal scratch']
  %s0 = inlined_call_operand.vmem [shape: f32[8,8], index: 0, kind: input, shape index: {}]
  %s1 = inlined_call_operand.vmem [shape: bf16[8,256], index: 1, kind: input, shape index: {}]
  %s2 = inlined_call_operand.vmem [shape: f32[1,256], index: 2, kind: input, shape index: {}]
  %s3 = inlined_call_operand.hbm [shape: bf16[256,256], index: 3, kind: input, shape index: {}]
  %s4 = inlined_call_operand.vmem [shape: f32[1,256], index: 4, kind: input, shape index: {}]
  %s5 = inlined_call_operand.hbm [shape: bf16[256,128], index: 5, kind: input, shape index: {}]
  %s6 = inlined_call_operand.vmem [shape: f32[1,128], index: 6, kind: input, shape index: {}]
  %s7 = inlined_call_operand.vmem [shape: f32[8,128], index: 7, kind: output, shape index: {}]
  %s8 = sld [smem:[#allocation0]]
  $region46: #{actor_forward.1} parent=0
    _
  %s10 = ssub.s32 1, %s8
  %s11 = scalar_select 0, %s10, %s8
  $region1: #{actor_forward.1} parent=0
    #allocation2 [shape = 'u8[131072]{0}', space=vmem, size = 0x20000, scoped, tag = 'input window, operand 3, single buffered']
    #allocation3 [shape = 's32[1]{0}', space=sflag, size = 0x4, scoped, tag = 'scoped memory for actor_forward.1']
    #allocation4 [shape = 'u8[65536]{0}', space=vmem, size = 0x10000, scoped, tag = 'input window, operand 5, single buffered']
    #allocation5 [shape = 's32[1]{0}', space=sflag, size = 0x4, scoped, tag = 'scoped memory for actor_forward.1']
    %12 = vsyncpa [#allocation3], 0
    %13 = vsyncpa [#allocation5], 0
    // Predicated region
    $region2: #{actor_forward.1} parent=1 // pred_check
      _
    $region3: #{actor_forward.1} parent=1 // pred_check_branch
      %15 = sbr.rel (0) target = $region5
    $region4: #{actor_forward.1} parent=1 // pred_region
      _
    $region5: #{actor_forward.1} parent=1 // pred_fallthru
      _
    // Predicated region
    $region6: #{actor_forward.1} parent=1 // pred_check
      _
    $region7: #{actor_forward.1} parent=1 // pred_check_branch
      %17 = sbr.rel (0) target = $region9
    $region8: #{actor_forward.1} parent=1 // pred_region
      _
    $region9: #{actor_forward.1} parent=1 // pred_fallthru
      _
    // Predicated region
    $region10: #{actor_forward.1} parent=1 // pred_check
      _
    $region11: #{actor_forward.1} parent=1 // pred_check_branch
      %19 = sbr.rel (0) target = $region13
    $region12: #{actor_forward.1} parent=1 // pred_region
      _
    $region13: #{actor_forward.1} parent=1 // pred_fallthru
      _
    // Predicated region
    $region14: #{actor_forward.1} parent=1 // pred_check
      _
    $region15: #{actor_forward.1} parent=1 // pred_check_branch
      %21 = sbr.rel (0) target = $region17
    $region16: #{actor_forward.1} parent=1 // pred_region
      %s23 = ssub.s32 4096, 4096
      %24 = vsyncadd [#allocation3], %s23
      %s25 = sshll.u32 [#allocation2], 4
      %s26 = int_to_ptr.vmem [resolvable:$true] %s25
      %31 = dma.hbm_to_vmem [thread:$0]  %s3, 4096, %s26, [#allocation3], 128, 128, 8
    $region17: #{actor_forward.1} parent=1 // pred_fallthru
      _
    // Predicated region
    $region18: #{actor_forward.1} parent=1 // pred_check
      _
    $region19: #{actor_forward.1} parent=1 // pred_check_branch
      %33 = sbr.rel (0) target = $region21
    $region20: #{actor_forward.1} parent=1 // pred_region
      _
    $region21: #{actor_forward.1} parent=1 // pred_fallthru
      _
    // Predicated region
    $region22: #{actor_forward.1} parent=1 // pred_check
      _
    $region23: #{actor_forward.1} parent=1 // pred_check_branch
      %35 = sbr.rel (0) target = $region25
    $region24: #{actor_forward.1} parent=1 // pred_region
      %s37 = ssub.s32 2048, 2048
      %38 = vsyncadd [#allocation5], %s37
      %s39 = sshll.u32 [#allocation4], 4
      %s40 = int_to_ptr.vmem [resolvable:$true] %s39
      %45 = dma.hbm_to_vmem [thread:$0]  %s5, 2048, %s40, [#allocation5], 64, 64, 4
    $region25: #{actor_forward.1} parent=1 // pred_fallthru
      _
    // Predicated region
    $region26: #{actor_forward.1} parent=1 // pred_check
      _
    $region27: #{actor_forward.1} parent=1 // pred_check_branch
      %47 = sbr.rel (0) target = $region29
    $region28: #{actor_forward.1} parent=1 // pred_region
      _
    $region29: #{actor_forward.1} parent=1 // pred_fallthru
      _
    // Predicated region
    $region30: #{actor_forward.1} parent=1 // pred_check
      _
    $region31: #{actor_forward.1} parent=1 // pred_check_branch
      %49 = sbr.rel (0) target = $region33
    $region32: #{actor_forward.1} parent=1 // pred_region
      %50 = dma.done [#allocation3], 4096
    $region33: #{actor_forward.1} parent=1 // pred_fallthru
      _
    // Predicated region
    $region34: #{actor_forward.1} parent=1 // pred_check
      _
    $region35: #{actor_forward.1} parent=1 // pred_check_branch
      %52 = sbr.rel (0) target = $region37
    $region36: #{actor_forward.1} parent=1 // pred_region
      %53 = dma.done [#allocation5], 2048
    $region37: #{actor_forward.1} parent=1 // pred_fallthru
      _
    %v55 = vld [vmem:[%s0] sm:$0xff]
    %v56 = vpack.c.bf16 %v55, %v55
    %v57 = vld [vmem:[%s1] sm:$0xff]
    %v58 = vld [vmem:[%s2] sm:$0x3]
    %v60 = vlaneseq
    %v61 = vshrl.u32 %v60, 7
    %v62 = vsub.s32 0, %v61
    %v63 = vrot.slane %v58, %v62
    %v64 = vlaneseq
    %v65 = vshrl.u32 %v64, 7
    %v66 = vsub.s32 1, %v65
    %v67 = vrot.slane %v58, %v66
    %v71 = vunpack.c.l.b16 %v57
    %v72 = vunpack.c.h.b16 %v57
    %v73 = vpack.c.b16 %v71, %v71
    %v74 = vpack.c.b16 %v72, %v72
    %vm75 = vcmask 64512
    %v77 = vsel %vm75, %v56, 0
    %vm79 = vcmask 1043456
    %v81 = vsel %vm79, %v73, 0
    %v84 = vsel %vm79, %v74, 0
    %86 = vmatprep.subr.bf16.mxu0 0
    %87 = vmatpush1.bf16.msra.mxu0 0
    %88 = vmatprep.subr.bf16.mxu0 0
    %89 = vmatpush1.bf16.msra.mxu0 0
    %90 = vmatprep.subr.bf16.mxu0 0
    %91 = vmatpush1.bf16.msra.mxu0 0
    %92 = vmatprep.subr.bf16.mxu0 0
    %93 = vmatpush1.bf16.msra.mxu0 0
    %94 = vmatprep.subr.bf16.mxu0 0
    %95 = vmatpush1.bf16.msra.mxu0 0
    %96 = vmatprep.subr.bf16.mxu0 0
    %97 = vmatpush1.bf16.msra.mxu0 0
    %98 = vmatprep.subr.bf16.mxu0 0
    %99 = vmatpush1.bf16.msra.mxu0 0
    %100 = vmatprep.subr.bf16.mxu0 %v84
    %101 = vmatpush1.bf16.msra.mxu0 %v81
    %102 = vmatprep.subr.bf16.mxu0 0
    %103 = vmatpush2.bf16.msra.mxu0 0
    %104 = vmatprep.subr.bf16.mxu0 0
    %105 = vmatpush2.bf16.msra.mxu0 0
    %106 = vmatprep.subr.bf16.mxu0 0
    %107 = vmatpush2.bf16.msra.mxu0 0
    %108 = vmatprep.subr.bf16.mxu0 0
    %109 = vmatpush2.bf16.msra.mxu0 0
    %110 = vmatprep.subr.bf16.mxu0 0
    %111 = vmatpush2.bf16.msra.mxu0 0
    %112 = vmatprep.subr.bf16.mxu0 0
    %113 = vmatpush2.bf16.msra.mxu0 0
    %114 = vmatprep.subr.bf16.mxu0 0
    %115 = vmatpush2.bf16.msra.mxu0 0
    %116 = vmatprep.subr.bf16.mxu0 0
    %117 = vmatpush2.bf16.msra.mxu0 0
    %118 = vmatprep.mubr.bf16.mxu0 0
    %119 = vmatmul.mubr.bf16.gmra.mxu0 %v77
    %v120 = vpop.f32.mrf.mxu0
    %v121 = vadd.f32 %v63, %v120
    %v122 = vpop.f32.mrf.mxu0
    %v123 = vadd.f32 %v67, %v122
    %v124 = vpop.f32.mrf.mxu0
    %v125 = vpop.f32.mrf.mxu0
    %126 = vdwg.mxu0
    %v127 = vmax.f32 %v121, 0.0
    %v128 = vmax.f32 %v123, 0.0
    %v129 = vpack.c.bf16 %v127, %v127
    %v130 = vpack.c.bf16 %v128, %v128
    %v131 = vld [vmem:[#allocation2] sm:$0xff]
    %v132 = vld [vmem:[#allocation2 + $0x8] sm:$0xff]
    %v133 = vld [vmem:[#allocation2 + $0x10] sm:$0xff]
    %v134 = vld [vmem:[#allocation2 + $0x18] sm:$0xff]
    %v135 = vld [vmem:[#allocation2 + $0x20] sm:$0xff]
    %v136 = vld [vmem:[#allocation2 + $0x28] sm:$0xff]
    %v137 = vld [vmem:[#allocation2 + $0x30] sm:$0xff]
    %v138 = vld [vmem:[#allocation2 + $0x38] sm:$0xff]
    %v139 = vld [vmem:[#allocation2 + $0x40] sm:$0xff]
    %v140 = vld [vmem:[#allocation2 + $0x48] sm:$0xff]
    %v141 = vld [vmem:[#allocation2 + $0x50] sm:$0xff]
    %v142 = vld [vmem:[#allocation2 + $0x58] sm:$0xff]
    %v143 = vld [vmem:[#allocation2 + $0x60] sm:$0xff]
    %v144 = vld [vmem:[#allocation2 + $0x68] sm:$0xff]
    %v145 = vld [vmem:[#allocation2 + $0x70] sm:$0xff]
    %v146 = vld [vmem:[#allocation2 + $0x78] sm:$0xff]
    %v147 = vld [vmem:[#allocation2 + $0x80] sm:$0xff]
    %v148 = vld [vmem:[#allocation2 + $0x88] sm:$0xff]
    %v149 = vld [vmem:[#allocation2 + $0x90] sm:$0xff]
    %v150 = vld [vmem:[#allocation2 + $0x98] sm:$0xff]
    %v151 = vld [vmem:[#allocation2 + $0xa0] sm:$0xff]
    %v152 = vld [vmem:[#allocation2 + $0xa8] sm:$0xff]
    %v153 = vld [vmem:[#allocation2 + $0xb0] sm:$0xff]
    %v154 = vld [vmem:[#allocation2 + $0xb8] sm:$0xff]
    %v155 = vld [vmem:[#allocation2 + $0xc0] sm:$0xff]
    %v156 = vld [vmem:[#allocation2 + $0xc8] sm:$0xff]
    %v157 = vld [vmem:[#allocation2 + $0xd0] sm:$0xff]
    %v158 = vld [vmem:[#allocation2 + $0xd8] sm:$0xff]
    %v159 = vld [vmem:[#allocation2 + $0xe0] sm:$0xff]
    %v160 = vld [vmem:[#allocation2 + $0xe8] sm:$0xff]
    %v161 = vld [vmem:[#allocation2 + $0xf0] sm:$0xff]
    %v162 = vld [vmem:[#allocation2 + $0xf8] sm:$0xff]
    %v163 = vld [vmem:[%s4] sm:$0x3]
    %v165 = vlaneseq
    %v166 = vshrl.u32 %v165, 7
    %v167 = vsub.s32 0, %v166
    %v168 = vrot.slane %v163, %v167
    %v169 = vlaneseq
    %v170 = vshrl.u32 %v169, 7
    %v171 = vsub.s32 1, %v170
    %v172 = vrot.slane %v163, %v171
    %v207 = vunpack.c.l.b16 %v131
    %v208 = vunpack.c.h.b16 %v131
    %v209 = vunpack.c.l.b16 %v132
    %v210 = vunpack.c.h.b16 %v132
    %v211 = vunpack.c.l.b16 %v133
    %v212 = vunpack.c.h.b16 %v133
    %v213 = vunpack.c.l.b16 %v134
    %v214 = vunpack.c.h.b16 %v134
    %v215 = vunpack.c.l.b16 %v135
    %v216 = vunpack.c.h.b16 %v135
    %v217 = vunpack.c.l.b16 %v136
    %v218 = vunpack.c.h.b16 %v136
    %v219 = vunpack.c.l.b16 %v137
    %v220 = vunpack.c.h.b16 %v137
    %v221 = vunpack.c.l.b16 %v138
    %v222 = vunpack.c.h.b16 %v138
    %v223 = vunpack.c.l.b16 %v139
    %v224 = vunpack.c.h.b16 %v139
    %v225 = vunpack.c.l.b16 %v140
    %v226 = vunpack.c.h.b16 %v140
    %v227 = vunpack.c.l.b16 %v141
    %v228 = vunpack.c.h.b16 %v141
    %v229 = vunpack.c.l.b16 %v142
    %v230 = vunpack.c.h.b16 %v142
    %v231 = vunpack.c.l.b16 %v143
    %v232 = vunpack.c.h.b16 %v143
    %v233 = vunpack.c.l.b16 %v144
    %v234 = vunpack.c.h.b16 %v144
    %v235 = vunpack.c.l.b16 %v145
    %v236 = vunpack.c.h.b16 %v145
    %v237 = vunpack.c.l.b16 %v146
    %v238 = vunpack.c.h.b16 %v146
    %v239 = vunpack.c.l.b16 %v147
    %v240 = vunpack.c.h.b16 %v147
    %v241 = vunpack.c.l.b16 %v148
    %v242 = vunpack.c.h.b16 %v148
    %v243 = vunpack.c.l.b16 %v149
    %v244 = vunpack.c.h.b16 %v149
    %v245 = vunpack.c.l.b16 %v150
    %v246 = vunpack.c.h.b16 %v150
    %v247 = vunpack.c.l.b16 %v151
    %v248 = vunpack.c.h.b16 %v151
    %v249 = vunpack.c.l.b16 %v152
    %v250 = vunpack.c.h.b16 %v152
    %v251 = vunpack.c.l.b16 %v153
    %v252 = vunpack.c.h.b16 %v153
    %v253 = vunpack.c.l.b16 %v154
    %v254 = vunpack.c.h.b16 %v154
    %v255 = vunpack.c.l.b16 %v155
    %v256 = vunpack.c.h.b16 %v155
    %v257 = vunpack.c.l.b16 %v156
    %v258 = vunpack.c.h.b16 %v156
    %v259 = vunpack.c.l.b16 %v157
    %v260 = vunpack.c.h.b16 %v157
    %v261 = vunpack.c.l.b16 %v158
    %v262 = vunpack.c.h.b16 %v158
    %v263 = vunpack.c.l.b16 %v159
    %v264 = vunpack.c.h.b16 %v159
    %v265 = vunpack.c.l.b16 %v160
    %v266 = vunpack.c.h.b16 %v160
    %v267 = vunpack.c.l.b16 %v161
    %v268 = vunpack.c.h.b16 %v161
    %v269 = vunpack.c.l.b16 %v162
    %v270 = vunpack.c.h.b16 %v162
    %v271 = vpack.c.b16 %v209, %v207
    %v272 = vpack.c.b16 %v210, %v208
    %v273 = vpack.c.b16 %v213, %v211
    %v274 = vpack.c.b16 %v214, %v212
    %v275 = vpack.c.b16 %v217, %v215
    %v276 = vpack.c.b16 %v218, %v216
    %v277 = vpack.c.b16 %v221, %v219
    %v278 = vpack.c.b16 %v222, %v220
    %v279 = vpack.c.b16 %v225, %v223
    %v280 = vpack.c.b16 %v226, %v224
    %v281 = vpack.c.b16 %v229, %v227
    %v282 = vpack.c.b16 %v230, %v228
    %v283 = vpack.c.b16 %v233, %v231
    %v284 = vpack.c.b16 %v234, %v232
    %v285 = vpack.c.b16 %v237, %v235
    %v286 = vpack.c.b16 %v238, %v236
    %v287 = vpack.c.b16 %v241, %v239
    %v288 = vpack.c.b16 %v242, %v240
    %v289 = vpack.c.b16 %v245, %v243
    %v290 = vpack.c.b16 %v246, %v244
    %v291 = vpack.c.b16 %v249, %v247
    %v292 = vpack.c.b16 %v250, %v248
    %v293 = vpack.c.b16 %v253, %v251
    %v294 = vpack.c.b16 %v254, %v252
    %v295 = vpack.c.b16 %v257, %v255
    %v296 = vpack.c.b16 %v258, %v256
    %v297 = vpack.c.b16 %v261, %v259
    %v298 = vpack.c.b16 %v262, %v260
    %v299 = vpack.c.b16 %v265, %v263
    %v300 = vpack.c.b16 %v266, %v264
    %v301 = vpack.c.b16 %v269, %v267
    %v302 = vpack.c.b16 %v270, %v268
    %335 = vmatprep.subr.bf16.mxu0 %v286
    %336 = vmatpush1.bf16.msra.mxu0 %v285
    %337 = vmatprep.subr.bf16.mxu0 %v284
    %338 = vmatpush1.bf16.msra.mxu0 %v283
    %339 = vmatprep.subr.bf16.mxu0 %v282
    %340 = vmatpush1.bf16.msra.mxu0 %v281
    %341 = vmatprep.subr.bf16.mxu0 %v280
    %342 = vmatpush1.bf16.msra.mxu0 %v279
    %343 = vmatprep.subr.bf16.mxu0 %v278
    %344 = vmatpush1.bf16.msra.mxu0 %v277
    %345 = vmatprep.subr.bf16.mxu0 %v276
    %346 = vmatpush1.bf16.msra.mxu0 %v275
    %347 = vmatprep.subr.bf16.mxu0 %v274
    %348 = vmatpush1.bf16.msra.mxu0 %v273
    %349 = vmatprep.subr.bf16.mxu0 %v272
    %350 = vmatpush1.bf16.msra.mxu0 %v271
    %351 = vmatprep.subr.bf16.mxu0 %v302
    %352 = vmatpush2.bf16.msra.mxu0 %v301
    %353 = vmatprep.subr.bf16.mxu0 %v300
    %354 = vmatpush2.bf16.msra.mxu0 %v299
    %355 = vmatprep.subr.bf16.mxu0 %v298
    %356 = vmatpush2.bf16.msra.mxu0 %v297
    %357 = vmatprep.subr.bf16.mxu0 %v296
    %358 = vmatpush2.bf16.msra.mxu0 %v295
    %359 = vmatprep.subr.bf16.mxu0 %v294
    %360 = vmatpush2.bf16.msra.mxu0 %v293
    %361 = vmatprep.subr.bf16.mxu0 %v292
    %362 = vmatpush2.bf16.msra.mxu0 %v291
    %363 = vmatprep.subr.bf16.mxu0 %v290
    %364 = vmatpush2.bf16.msra.mxu0 %v289
    %365 = vmatprep.subr.bf16.mxu0 %v288
    %366 = vmatpush2.bf16.msra.mxu0 %v287
    %367 = vmatprep.mubr.bf16.mxu0 %v130
    %368 = vmatmul.mubr.bf16.gmra.mxu0 %v129
    %v369 = vpop.f32.mrf.mxu0
    %v370 = vadd.f32 %v168, %v369
    %v371 = vpop.f32.mrf.mxu0
    %v372 = vadd.f32 %v172, %v371
    %v373 = vpop.f32.mrf.mxu0
    %v374 = vpop.f32.mrf.mxu0
    %375 = vdwg.mxu0
    %v376 = vmax.f32 %v370, 0.0
    %v377 = vmax.f32 %v372, 0.0
    %v378 = vpack.c.bf16 %v376, %v376
    %v379 = vpack.c.bf16 %v377, %v377
    %v380 = vld [vmem:[#allocation4] sm:$0xf]
    %v381 = vld [vmem:[#allocation4 + $0x4] sm:$0xf]
    %v382 = vld [vmem:[#allocation4 + $0x8] sm:$0xf]
    %v383 = vld [vmem:[#allocation4 + $0xc] sm:$0xf]
    %v384 = vld [vmem:[#allocation4 + $0x10] sm:$0xf]
    %v385 = vld [vmem:[#allocation4 + $0x14] sm:$0xf]
    %v386 = vld [vmem:[#allocation4 + $0x18] sm:$0xf]
    %v387 = vld [vmem:[#allocation4 + $0x1c] sm:$0xf]
    %v388 = vld [vmem:[#allocation4 + $0x20] sm:$0xf]
    %v389 = vld [vmem:[#allocation4 + $0x24] sm:$0xf]
    %v390 = vld [vmem:[#allocation4 + $0x28] sm:$0xf]
    %v391 = vld [vmem:[#allocation4 + $0x2c] sm:$0xf]
    %v392 = vld [vmem:[#allocation4 + $0x30] sm:$0xf]
    %v393 = vld [vmem:[#allocation4 + $0x34] sm:$0xf]
    %v394 = vld [vmem:[#allocation4 + $0x38] sm:$0xf]
    %v395 = vld [vmem:[#allocation4 + $0x3c] sm:$0xf]
    %v396 = vld [vmem:[#allocation4 + $0x40] sm:$0xf]
    %v397 = vld [vmem:[#allocation4 + $0x44] sm:$0xf]
    %v398 = vld [vmem:[#allocation4 + $0x48] sm:$0xf]
    %v399 = vld [vmem:[#allocation4 + $0x4c] sm:$0xf]
    %v400 = vld [vmem:[#allocation4 + $0x50] sm:$0xf]
    %v401 = vld [vmem:[#allocation4 + $0x54] sm:$0xf]
    %v402 = vld [vmem:[#allocation4 + $0x58] sm:$0xf]
    %v403 = vld [vmem:[#allocation4 + $0x5c] sm:$0xf]
    %v404 = vld [vmem:[#allocation4 + $0x60] sm:$0xf]
    %v405 = vld [vmem:[#allocation4 + $0x64] sm:$0xf]
    %v406 = vld [vmem:[#allocation4 + $0x68] sm:$0xf]
    %v407 = vld [vmem:[#allocation4 + $0x6c] sm:$0xf]
    %v408 = vld [vmem:[#allocation4 + $0x70] sm:$0xf]
    %v409 = vld [vmem:[#allocation4 + $0x74] sm:$0xf]
    %v410 = vld [vmem:[#allocation4 + $0x78] sm:$0xf]
    %v411 = vld [vmem:[#allocation4 + $0x7c] sm:$0xf]
    %v412 = vld [vmem:[%s6] sm:$0x1]
    %v414 = vlaneseq
    %v415 = vshrl.u32 %v414, 7
    %v416 = vsub.s32 0, %v415
    %v417 = vrot.slane %v412, %v416
    %v451 = vunpack.c.l.b16 %v380
    %v452 = vunpack.c.l.b16 %v381
    %v453 = vunpack.c.l.b16 %v382
    %v454 = vunpack.c.l.b16 %v383
    %v455 = vunpack.c.l.b16 %v384
    %v456 = vunpack.c.l.b16 %v385
    %v457 = vunpack.c.l.b16 %v386
    %v458 = vunpack.c.l.b16 %v387
    %v459 = vunpack.c.l.b16 %v388
    %v460 = vunpack.c.l.b16 %v389
    %v461 = vunpack.c.l.b16 %v390
    %v462 = vunpack.c.l.b16 %v391
    %v463 = vunpack.c.l.b16 %v392
    %v464 = vunpack.c.l.b16 %v393
    %v465 = vunpack.c.l.b16 %v394
    %v466 = vunpack.c.l.b16 %v395
    %v467 = vunpack.c.l.b16 %v396
    %v468 = vunpack.c.l.b16 %v397
    %v469 = vunpack.c.l.b16 %v398
    %v470 = vunpack.c.l.b16 %v399
    %v471 = vunpack.c.l.b16 %v400
    %v472 = vunpack.c.l.b16 %v401
    %v473 = vunpack.c.l.b16 %v402
    %v474 = vunpack.c.l.b16 %v403
    %v475 = vunpack.c.l.b16 %v404
    %v476 = vunpack.c.l.b16 %v405
    %v477 = vunpack.c.l.b16 %v406
    %v478 = vunpack.c.l.b16 %v407
    %v479 = vunpack.c.l.b16 %v408
    %v480 = vunpack.c.l.b16 %v409
    %v481 = vunpack.c.l.b16 %v410
    %v482 = vunpack.c.l.b16 %v411
    %v483 = vpack.c.b16 %v452, %v451
    %v484 = vpack.c.b16 %v454, %v453
    %v485 = vpack.c.b16 %v456, %v455
    %v486 = vpack.c.b16 %v458, %v457
    %v487 = vpack.c.b16 %v460, %v459
    %v488 = vpack.c.b16 %v462, %v461
    %v489 = vpack.c.b16 %v464, %v463
    %v490 = vpack.c.b16 %v466, %v465
    %v491 = vpack.c.b16 %v468, %v467
    %v492 = vpack.c.b16 %v470, %v469
    %v493 = vpack.c.b16 %v472, %v471
    %v494 = vpack.c.b16 %v474, %v473
    %v495 = vpack.c.b16 %v476, %v475
    %v496 = vpack.c.b16 %v478, %v477
    %v497 = vpack.c.b16 %v480, %v479
    %v498 = vpack.c.b16 %v482, %v481
    %515 = vmatprep.subr.bf16.mxu0 0
    %516 = vmatpush1.bf16.msra.mxu0 %v490
    %517 = vmatprep.subr.bf16.mxu0 0
    %518 = vmatpush1.bf16.msra.mxu0 %v489
    %519 = vmatprep.subr.bf16.mxu0 0
    %520 = vmatpush1.bf16.msra.mxu0 %v488
    %521 = vmatprep.subr.bf16.mxu0 0
    %522 = vmatpush1.bf16.msra.mxu0 %v487
    %523 = vmatprep.subr.bf16.mxu0 0
    %524 = vmatpush1.bf16.msra.mxu0 %v486
    %525 = vmatprep.subr.bf16.mxu0 0
    %526 = vmatpush1.bf16.msra.mxu0 %v485
    %527 = vmatprep.subr.bf16.mxu0 0
    %528 = vmatpush1.bf16.msra.mxu0 %v484
    %529 = vmatprep.subr.bf16.mxu0 0
    %530 = vmatpush1.bf16.msra.mxu0 %v483
    %531 = vmatprep.subr.bf16.mxu0 0
    %532 = vmatpush2.bf16.msra.mxu0 %v498
    %533 = vmatprep.subr.bf16.mxu0 0
    %534 = vmatpush2.bf16.msra.mxu0 %v497
    %535 = vmatprep.subr.bf16.mxu0 0
    %536 = vmatpush2.bf16.msra.mxu0 %v496
    %537 = vmatprep.subr.bf16.mxu0 0
    %538 = vmatpush2.bf16.msra.mxu0 %v495
    %539 = vmatprep.subr.bf16.mxu0 0
    %540 = vmatpush2.bf16.msra.mxu0 %v494
    %541 = vmatprep.subr.bf16.mxu0 0
    %542 = vmatpush2.bf16.msra.mxu0 %v493
    %543 = vmatprep.subr.bf16.mxu0 0
    %544 = vmatpush2.bf16.msra.mxu0 %v492
    %545 = vmatprep.subr.bf16.mxu0 0
    %546 = vmatpush2.bf16.msra.mxu0 %v491
    %547 = vmatprep.mubr.bf16.mxu0 %v379
    %548 = vmatmul.mubr.bf16.gmra.mxu0 %v378
    %v549 = vpop.f32.mrf.mxu0
    %v550 = vadd.f32 %v417, %v549
    %v551 = vpop.f32.mrf.mxu0
    %v552 = vpop.f32.mrf.mxu0
    %v553 = vpop.f32.mrf.mxu0
    %554 = vdwg.mxu0
    %v555 = vmax.f32 %v550, -20.0
    %v556 = vmin.f32 %v555, 2.0
    %v557 = vmul.f32 %v556, 1.442695
    %v558 = vpow.pop %v557
    %v559 = vlaneseq
    %v560 = vand.u32 %v559, 127
    %vm561 = vcmp.lt.s32.totalorder %v560, 1
    %v562 = vsel %vm561, %v550, %v558
    %563 = vst [vmem:[%s7] sm:$0xff] %v562
    // Predicated region
    $region38: #{actor_forward.1} parent=1 // pred_check
      _
    $region39: #{actor_forward.1} parent=1 // pred_check_branch
      %565 = sbr.rel (0) target = $region41
    $region40: #{actor_forward.1} parent=1 // pred_region
      _
    $region41: #{actor_forward.1} parent=1 // pred_fallthru
      _
    // Predicated region
    $region42: #{actor_forward.1} parent=1 // pred_check
      _
    $region43: #{actor_forward.1} parent=1 // pred_check_branch
      %567 = sbr.rel (0) target = $region45
    $region44: #{actor_forward.1} parent=1 // pred_region
      _
    $region45: #{actor_forward.1} parent=1 // pred_fallthru
      _
    %568 = vsyncpa [#allocation3], 1
    %569 = vsyncpa [#allocation5], 1

</llo_original>
